<compile_context>
chip_gen: v5e
topology: v5e:2x2
jax: 0.10.0
libtpu: 0.0.40
codegen_flags: <defaults>
</compile_context>

<pallas_src>
from functools import partial

import jax
import jax.numpy as jnp
from jax.experimental import pallas as pl
from jax.experimental.pallas import tpu as pltpu

NUM_HIDDEN = 8
_LANE = 128
_VMEM_BUDGET = 24 * 1024 * 1024     # budget for the double-buffered x/out tiles
_VMEM_LIMIT = 32 * 1024 * 1024      # scoped VMEM request (fits v5e/v6e/v7x physical)


def _q_estimator_kernel(xT_ref, w1T_ref, b1_ref, w2T_ref, b2_ref, oT_ref, *, chunk):
    # Feature-major, batch-on-lanes operands:
    #   xT : (F, TB)   w1T: (H, F)   b1: (H, 1)
    #   w2T: (A, H)    b2 : (A, 1)   oT: (A, TB)
    w1T = w1T_ref[...].astype(jnp.float32)
    b1 = b1_ref[...]
    w2T = w2T_ref[...].astype(jnp.float32)
    b2 = b2_ref[...]

    tb = xT_ref.shape[-1]
    n_chunks = tb // chunk

    def compute(xc):
        # xc: (F, chunk).  Small-K MXU matmuls; compute hides under the tile DMA.
        hc = jnp.tanh(jnp.dot(w1T, xc.astype(jnp.float32),
                              preferred_element_type=jnp.float32) + b1)
        qc = jnp.dot(w2T, hc, preferred_element_type=jnp.float32) + b2
        return qc.astype(oT_ref.dtype)

    if n_chunks == 1:
        oT_ref[...] = compute(xT_ref[...])
    else:
        def body(c, carry):
            off = pl.multiple_of(c * chunk, _LANE)
            oT_ref[:, pl.ds(off, chunk)] = compute(xT_ref[:, pl.ds(off, chunk)])
            return carry

        # Bounded unrolling keeps the hidden in vregs without exploding code size.
        unroll = True if n_chunks <= 32 else 8
        jax.lax.fori_loop(0, n_chunks, body, None, unroll=unroll)


def _round_up(n, m):
    return (n + m - 1) // m * m


def _select_tiles(batch, block_b, chunk_b, x_itemsize):
    """Pick (tb, chunk): lane-multiple batch tile + in-kernel lane-chunk size."""
    # Per-lane VMEM of the pipelined tiles: x + out, double-buffered, sublanes
    # rounded up to 8 by the (8,128) tiling (F=4 / A=3 both pad to 8 sublanes).
    bytes_per_lane = 2 * 8 * (x_itemsize + 4)
    vmem_cap = max(_LANE, (_VMEM_BUDGET // bytes_per_lane) // _LANE * _LANE)
    # Guarantee >=2 grid steps so ("parallel",) can feed both v7x TensorCores.
    two_core_cap = max(_LANE, _round_up(pl.cdiv(batch, 2), _LANE))

    tb = min(_round_up(block_b, _LANE), _round_up(batch, _LANE),
             vmem_cap, two_core_cap)
    tb = max(tb, _LANE)

    chunk = min(_round_up(chunk_b, _LANE), tb)
    while tb % chunk != 0:          # both are multiples of 128; terminates at 128
        chunk -= _LANE
    return tb, chunk


def q_estimator_forward_feature_major(xT, w1, b1, w2, b2, *,
                                      block_b=131072, chunk_b=8192):
    """Zero-copy hot path.

    Args:
      xT: (num_obs_features, B) observations, feature-major (batch on lanes).
      w1: (num_obs_features, num_hidden), b1: (num_hidden,)
      w2: (num_hidden, num_actions),      b2: (num_actions,)
    Returns:
      (num_actions, B) q-values, feature-major.
    """
    F, B = xT.shape
    H = w1.shape[1]
    A = w2.shape[1]
    x_itemsize = jnp.dtype(xT.dtype).itemsize

    tb, chunk = _select_tiles(B, block_b, chunk_b, x_itemsize)
    grid = (pl.cdiv(B, tb),)        # ragged last block: reads padded, writes clipped

    w1T = w1.T                      # (H, F)
    w2T = w2.T                      # (A, H)
    b1c = b1.reshape(H, 1)
    b2c = b2.reshape(A, 1)

    cost = pl.CostEstimate(
        flops=B * (2 * F * H + 2 * H * A + H + A),
        transcendentals=B * H,
        bytes_accessed=B * (F * x_itemsize + A * 4) + (F * H + H + H * A + A) * 4,
    )

    return pl.pallas_call(
        partial(_q_estimator_kernel, chunk=chunk),
        out_shape=jax.ShapeDtypeStruct((A, B), jnp.float32),
        grid_spec=pltpu.PrefetchScalarGridSpec(
            num_scalar_prefetch=0,
            grid=grid,
            in_specs=[
                # x tile streams over the batch (double-buffered by the pipeline).
                pl.BlockSpec((F, tb), lambda i: (0, i)),
                # Weights / biases: constant index_map -> resident in VMEM.
                pl.BlockSpec((H, F), lambda i: (0, 0)),
                pl.BlockSpec((H, 1), lambda i: (0, 0)),
                pl.BlockSpec((A, H), lambda i: (0, 0)),
                pl.BlockSpec((A, 1), lambda i: (0, 0)),
            ],
            out_specs=pl.BlockSpec((A, tb), lambda i: (0, i)),
        ),
        compiler_params=pltpu.CompilerParams(
            dimension_semantics=("parallel",),   # shard steps across v7x TCs
            vmem_limit_bytes=_VMEM_LIMIT,        # v5e default is 16 MiB; raise it
        ),
        cost_estimate=cost,
    )(xT, w1T, b1c, w2T, b2c)


def q_estimator_forward(x, w1, b1, w2, b2, *, block_b=131072, chunk_b=8192,
                        min_pallas_batch=8192, force_pallas=False, x_dtype=None):
    """PyTorch-contract forward: x (B, F) -> (B, A).

    Prefer q_estimator_forward_feature_major() in hot loops: this wrapper's
    x.T / result.T copies roughly triple HBM traffic for an HBM-bound op.
    `x_dtype=jnp.bfloat16` folds a down-cast into the transpose copy (halves the
    kernel's input read; gate on an accuracy check).
    """
    B, F = x.shape

    if B < min_pallas_batch and not force_pallas:
        # Small problems: pallas_call launch + wrapper transposes exceed what a
        # fused XLA tanh(x@W1+b1)@W2+b2 costs.  Tune min_pallas_batch empirically.
        return jnp.tanh(x @ w1 + b1) @ w2 + b2

    xT = x.T if x_dtype is None else x.T.astype(x_dtype)
    qT = q_estimator_forward_feature_major(xT, w1, b1, w2, b2,
                                           block_b=block_b, chunk_b=chunk_b)
    return qT.T


def reference_forward(x, w1, b1, w2, b2):
    h = jnp.tanh(x @ w1 + b1)
    return h @ w2 + b2


if __name__ == "__main__":
    num_obs_features = 4
    num_actions = 3

    key = jax.random.PRNGKey(0)
    k_w1, k_b1, k_w2, k_b2, k_x1, k_x2, k_x3, k_x4 = jax.random.split(key, 8)

    # Deterministic parameter init (mimicking nn.Linear uniform bounds).
    bound1 = 1.0 / jnp.sqrt(num_obs_features)
    w1 = jax.random.uniform(k_w1, (num_obs_features, NUM_HIDDEN),
                            minval=-bound1, maxval=bound1, dtype=jnp.float32)
    b1 = jax.random.uniform(k_b1, (NUM_HIDDEN,),
                            minval=-bound1, maxval=bound1, dtype=jnp.float32)
    bound2 = 1.0 / jnp.sqrt(NUM_HIDDEN)
    w2 = jax.random.uniform(k_w2, (NUM_HIDDEN, num_actions),
                            minval=-bound2, maxval=bound2, dtype=jnp.float32)
    b2 = jax.random.uniform(k_b2, (num_actions,),
                            minval=-bound2, maxval=bound2, dtype=jnp.float32)

    # 1) Module-typical tiny batch (B=8), forced through the Pallas path:
    #    single ragged block (8 valid of 128 lanes), output writes clipped.
    x1 = jax.random.normal(k_x1, (8, num_obs_features), dtype=jnp.float32)
    o1 = jax.block_until_ready(q_estimator_forward(x1, w1, b1, w2, b2,
                                                   force_pallas=True))
    r1 = reference_forward(x1, w1, b1, w2, b2)
    assert o1.shape == (8, num_actions)
    assert jnp.allclose(o1, r1, atol=1e-5, rtol=1e-5), "tiny-batch mismatch"

    # 2) Multi-step grid with a ragged tail and VMEM-resident weights:
    #    B=500, block_b=128 -> tb=128, grid=(4,), last block 116 valid lanes.
    x2 = jax.random.normal(k_x2, (500, num_obs_features), dtype=jnp.float32)
    o2 = jax.block_until_ready(q_estimator_forward(x2, w1, b1, w2, b2,
                                                   block_b=128, force_pallas=True))
    r2 = reference_forward(x2, w1, b1, w2, b2)
    assert o2.shape == (500, num_actions)
    assert jnp.allclose(o2, r2, atol=1e-5, rtol=1e-5), "tiled-batch mismatch"

    # 3) In-kernel lane-chunk loop (fori_loop, unrolled) + the >=2-step clamp:
    #    B=1000, block_b=1024, chunk_b=128 -> tb=512, 4 chunks/step, grid=(2,).
    x3 = jax.random.normal(k_x3, (1000, num_obs_features), dtype=jnp.float32)
    o3 = jax.block_until_ready(q_estimator_forward(x3, w1, b1, w2, b2,
                                                   block_b=1024, chunk_b=128,
                                                   force_pallas=True))
    r3 = reference_forward(x3, w1, b1, w2, b2)
    assert o3.shape == (1000, num_actions)
    assert jnp.allclose(o3, r3, atol=1e-5, rtol=1e-5), "chunked-tile mismatch"

    # 4) Zero-copy feature-major hot path (no wrapper transposes), default tiling.
    x4 = jax.random.normal(k_x4, (640, num_obs_features), dtype=jnp.float32)
    o4T = jax.block_until_ready(
        q_estimator_forward_feature_major(x4.T, w1, b1, w2, b2))
    r4 = reference_forward(x4, w1, b1, w2, b2)
    assert o4T.shape == (num_actions, 640)
    assert jnp.allclose(o4T.T, r4, atol=1e-5, rtol=1e-5), "feature-major mismatch"

    print("KERNEL_OK")
</pallas_src>

<mosaic_0001>
module attributes {stable_mosaic.version = 11 : i64} {
  func.func @_q_estimator_kernel(%arg0: i32, %arg1: memref<4x128xf32, #tpu.memory_space<vmem>>, %arg2: memref<8x4xf32, #tpu.memory_space<vmem>>, %arg3: memref<8x1xf32, #tpu.memory_space<vmem>>, %arg4: memref<3x8xf32, #tpu.memory_space<vmem>>, %arg5: memref<3x1xf32, #tpu.memory_space<vmem>>, %arg6: memref<3x128xf32, #tpu.memory_space<vmem>>) attributes {dimension_semantics = [#tpu.dimension_semantics<parallel>], iteration_bounds = array<i64: 1>, scalar_prefetch = 0 : i64, scratch_operands = 0 : i64, tpu.core_type = #tpu.core_type<tc>, window_params = [{transform_indices = @transform_0, window_bounds = array<i64: 4, 128>}, {pipeline_mode = #tpu.pipeline_mode<synchronous>, transform_indices = @transform_1, window_bounds = array<i64: 8, 4>}, {pipeline_mode = #tpu.pipeline_mode<synchronous>, transform_indices = @transform_2, window_bounds = array<i64: 8, 1>}, {pipeline_mode = #tpu.pipeline_mode<synchronous>, transform_indices = @transform_3, window_bounds = array<i64: 3, 8>}, {pipeline_mode = #tpu.pipeline_mode<synchronous>, transform_indices = @transform_4, window_bounds = array<i64: 3, 1>}, {transform_indices = @transform_5, window_bounds = array<i64: 3, 128>}]} {
    %c0 = arith.constant 0 : index
    %c0_0 = arith.constant 0 : index
    %0 = vector.load %arg2[%c0, %c0_0] : memref<8x4xf32, #tpu.memory_space<vmem>>, vector<8x4xf32>
    %c0_1 = arith.constant 0 : index
    %c0_2 = arith.constant 0 : index
    %1 = vector.load %arg3[%c0_1, %c0_2] : memref<8x1xf32, #tpu.memory_space<vmem>>, vector<8x1xf32>
    %c0_3 = arith.constant 0 : index
    %c0_4 = arith.constant 0 : index
    %2 = vector.load %arg4[%c0_3, %c0_4] : memref<3x8xf32, #tpu.memory_space<vmem>>, vector<3x8xf32>
    %c0_5 = arith.constant 0 : index
    %c0_6 = arith.constant 0 : index
    %3 = vector.load %arg5[%c0_5, %c0_6] : memref<3x1xf32, #tpu.memory_space<vmem>>, vector<3x1xf32>
    %c0_7 = arith.constant 0 : index
    %c0_8 = arith.constant 0 : index
    %4 = vector.load %arg1[%c0_7, %c0_8] : memref<4x128xf32, #tpu.memory_space<vmem>>, vector<4x128xf32>
    %cst = arith.constant dense<0.000000e+00> : vector<8x128xf32>
    %5 = tpu.matmul %0, %4, %cst {dimension_numbers = #tpu.dot_dimension_numbers<[1], [0], [0], [1], [0, 0, 1, 1], [], []>} : vector<8x4xf32>, vector<4x128xf32>, vector<8x128xf32> -> vector<8x128xf32>
    %6 = vector.broadcast %1 : vector<8x1xf32> to vector<8x128xf32>
    %7 = arith.addf %5, %6 : vector<8x128xf32>
    %8 = math.tanh %7 : vector<8x128xf32>
    %cst_9 = arith.constant dense<0.000000e+00> : vector<3x128xf32>
    %9 = tpu.matmul %2, %8, %cst_9 {dimension_numbers = #tpu.dot_dimension_numbers<[1], [0], [0], [1], [0, 0, 1, 1], [], []>} : vector<3x8xf32>, vector<8x128xf32>, vector<3x128xf32> -> vector<3x128xf32>
    %10 = vector.broadcast %3 : vector<3x1xf32> to vector<3x128xf32>
    %11 = arith.addf %9, %10 : vector<3x128xf32>
    %c0_10 = arith.constant 0 : index
    %c0_11 = arith.constant 0 : index
    %12 = vector.load %arg6[%c0_10, %c0_11] : memref<3x128xf32, #tpu.memory_space<vmem>>, vector<3x128xf32>
    tpu.vector_store %arg6[%c0_10, %c0_11], %11 {strides = array<i32>} : memref<3x128xf32, #tpu.memory_space<vmem>>, vector<3x128xf32>,
    return
  }
  func.func @transform_0(%arg0: i32) -> (i32, i32) {
    %c0_i32 = arith.constant 0 : i32
    %c0_i32_0 = arith.constant 0 : i32
    return %c0_i32, %arg0 : i32, i32
  }
  func.func @transform_1(%arg0: i32) -> (i32, i32) {
    %c0_i32 = arith.constant 0 : i32
    %c0_i32_0 = arith.constant 0 : i32
    %c0_i32_1 = arith.constant 0 : i32
    return %c0_i32, %c0_i32_0 : i32, i32
  }
  func.func @transform_2(%arg0: i32) -> (i32, i32) {
    %c0_i32 = arith.constant 0 : i32
    %c0_i32_0 = arith.constant 0 : i32
    %c0_i32_1 = arith.constant 0 : i32
    return %c0_i32, %c0_i32_0 : i32, i32
  }
  func.func @transform_3(%arg0: i32) -> (i32, i32) {
    %c0_i32 = arith.constant 0 : i32
    %c0_i32_0 = arith.constant 0 : i32
    %c0_i32_1 = arith.constant 0 : i32
    return %c0_i32, %c0_i32_0 : i32, i32
  }
  func.func @transform_4(%arg0: i32) -> (i32, i32) {
    %c0_i32 = arith.constant 0 : i32
    %c0_i32_0 = arith.constant 0 : i32
    %c0_i32_1 = arith.constant 0 : i32
    return %c0_i32, %c0_i32_0 : i32, i32
  }
  func.func @transform_5(%arg0: i32) -> (i32, i32) {
    %c0_i32 = arith.constant 0 : i32
    %c0_i32_0 = arith.constant 0 : i32
    return %c0_i32, %arg0 : i32, i32
  }
}

</mosaic_0001>

<llo_original>
// kernel: tpu_custom_call.1
$region0: #{tpu_custom_call.1}
  #allocation0 [shape = 'u32[]', space=smem, size = 0x4, offset = 0x4, fixed_abs, tag = 'smem constant byte address 0x4 - core index']
  #allocation1 [shape = 'u32[72,128]{1,0:T(1,128)}', space=vmem, size = 0x9000, scoped, tag = 'internal scratch']
  %s0 = inlined_call_operand.vmem [shape: f32[4,8], index: 0, kind: input, shape index: {}]
  %s1 = inlined_call_operand.vmem [shape: f32[8,4], index: 1, kind: input, shape index: {}]
  %s2 = inlined_call_operand.vmem [shape: f32[8,1], index: 2, kind: input, shape index: {}]
  %s3 = inlined_call_operand.vmem [shape: f32[3,8], index: 3, kind: input, shape index: {}]
  %s4 = inlined_call_operand.vmem [shape: f32[3,1], index: 4, kind: input, shape index: {}]
  %s5 = inlined_call_operand.hbm [shape: f32[3,8], index: 5, kind: output, shape index: {}]
  %s6 = sld [smem:[#allocation0]]
  $region30: #{tpu_custom_call.1} parent=0
    _
  %s8 = ssub.s32 1, %s6
  %s9 = scalar_select 0, %s8, %s6
  $region1: #{tpu_custom_call.1} parent=0
    #allocation2 [shape = 'u8[2048]{0}', space=vmem, size = 0x800, scoped, tag = 'output window, operand 0, single buffered']
    #allocation3 [shape = 's32[1]{0}', space=sflag, size = 0x4, scoped, tag = 'scoped memory for tpu_custom_call.1']
    %10 = vsyncpa [#allocation3], 0
    // Predicated region
    $region2: #{tpu_custom_call.1} parent=1 // pred_check
      _
    $region3: #{tpu_custom_call.1} parent=1 // pred_check_branch
      %12 = sbr.rel (0) target = $region5
    $region4: #{tpu_custom_call.1} parent=1 // pred_region
      _
    $region5: #{tpu_custom_call.1} parent=1 // pred_fallthru
      _
    // Predicated region
    $region6: #{tpu_custom_call.1} parent=1 // pred_check
      _
    $region7: #{tpu_custom_call.1} parent=1 // pred_check_branch
      %14 = sbr.rel (0) target = $region9
    $region8: #{tpu_custom_call.1} parent=1 // pred_region
      _
    $region9: #{tpu_custom_call.1} parent=1 // pred_fallthru
      _
    // Predicated region
    $region10: #{tpu_custom_call.1} parent=1 // pred_check
      _
    $region11: #{tpu_custom_call.1} parent=1 // pred_check_branch
      %16 = sbr.rel (0) target = $region13
    $region12: #{tpu_custom_call.1} parent=1 // pred_region
      _
    $region13: #{tpu_custom_call.1} parent=1 // pred_fallthru
      _
    // Predicated region
    $region14: #{tpu_custom_call.1} parent=1 // pred_check
      _
    $region15: #{tpu_custom_call.1} parent=1 // pred_check_branch
      %18 = sbr.rel (0) target = $region17
    $region16: #{tpu_custom_call.1} parent=1 // pred_region
      _
    $region17: #{tpu_custom_call.1} parent=1 // pred_fallthru
      _
    // Predicated region
    $region18: #{tpu_custom_call.1} parent=1 // pred_check
      _
    $region19: #{tpu_custom_call.1} parent=1 // pred_check_branch
      %20 = sbr.rel (0) target = $region21
    $region20: #{tpu_custom_call.1} parent=1 // pred_region
      _
    $region21: #{tpu_custom_call.1} parent=1 // pred_fallthru
      _
    %v21 = vld [vmem:[%s1] sm:$0xff]
    %v22 = vld [vmem:[%s2] sm:$0xff]
    %v23 = vld [vmem:[%s3] sm:$0x7]
    %v24 = vld [vmem:[%s4] sm:$0x7]
    %v25 = vld [vmem:[%s0] sm:$0xf]
    %27 = vset.pattern.permute.xlu0 0
    %28 = vperm.xlu0 %27, %v22
    %v29 = vpop.permute.xlu0 %28
    %vm31 = vcmask 31744
    %v33 = vsel %vm31, %v21, 0
    %vm35 = vcmask 1043456
    %v37 = vsel %vm35, %v25, 0
    %39 = vmatpush.msra.mxu0 0.0
    %40 = vmatpush.msra.mxu0 0.0
    %41 = vmatpush.msra.mxu0 0.0
    %42 = vmatpush.msra.mxu0 0.0
    %43 = vmatpush.msra.mxu0 0.0
    %44 = vmatpush.msra.mxu0 0.0
    %45 = vmatpush.msra.mxu0 0.0
    %46 = vmatpush.msra.mxu0 0.0
    %47 = vmatpush.msra.mxu0 0.0
    %48 = vmatpush.msra.mxu0 0.0
    %49 = vmatpush.msra.mxu0 0.0
    %50 = vmatpush.msra.mxu0 0.0
    %51 = vmatpush.msra.mxu0 0.0
    %52 = vmatpush.msra.mxu0 0.0
    %53 = vmatpush.msra.mxu0 0.0
    %54 = vmatpush.msra.mxu0 %v37
    %55 = vmatmul.f32.gmra.mxu0 %v33
    %v56 = vpop.f32.mrf.mxu0
    %v57 = vadd.f32 %v29, %v56
    %58 = vdwg.mxu0
    %v59 = vtanh.pop %v57
    %61 = vset.pattern.permute.xlu0 0
    %62 = vperm.xlu0 %61, %v24
    %v63 = vpop.permute.xlu0 %62
    %vm65 = vcmask 64512
    %v67 = vsel %vm65, %v23, 0
    %69 = vmatpush.msra.mxu0 0.0
    %70 = vmatpush.msra.mxu0 0.0
    %71 = vmatpush.msra.mxu0 0.0
    %72 = vmatpush.msra.mxu0 0.0
    %73 = vmatpush.msra.mxu0 0.0
    %74 = vmatpush.msra.mxu0 0.0
    %75 = vmatpush.msra.mxu0 0.0
    %76 = vmatpush.msra.mxu0 0.0
    %77 = vmatpush.msra.mxu0 0.0
    %78 = vmatpush.msra.mxu0 0.0
    %79 = vmatpush.msra.mxu0 0.0
    %80 = vmatpush.msra.mxu0 0.0
    %81 = vmatpush.msra.mxu0 0.0
    %82 = vmatpush.msra.mxu0 0.0
    %83 = vmatpush.msra.mxu0 0.0
    %84 = vmatpush.msra.mxu0 %v59
    %85 = vmatmul.f32.gmra.mxu0 %v67
    %v86 = vpop.f32.mrf.mxu0
    %v87 = vadd.f32 %v63, %v86
    %88 = vdwg.mxu0
    %89 = vst [vmem:[#allocation2] sm:$0x7] %v87
    // Predicated region
    $region22: #{tpu_custom_call.1} parent=1 // pred_check
      _
    $region23: #{tpu_custom_call.1} parent=1 // pred_check_branch
      %91 = sbr.rel (0) target = $region25
    $region24: #{tpu_custom_call.1} parent=1 // pred_region
      %93 = vsyncadd [#allocation3], 0
      %s95 = sshll.u32 [#allocation2], 4
      %s96 = int_to_ptr.vmem [resolvable:$true] %s95
      %s97 = sshll.u32 %s5, 4
      %s98 = int_to_ptr.hbm [resolvable:$true] %s97
      %100 = dma.vmem_to_hbm [thread:$0]  %s96, 64, %s98, [#allocation3]
    $region25: #{tpu_custom_call.1} parent=1 // pred_fallthru
      _
    // Predicated region
    $region26: #{tpu_custom_call.1} parent=1 // pred_check
      _
    $region27: #{tpu_custom_call.1} parent=1 // pred_check_branch
      %102 = sbr.rel (0) target = $region29
    $region28: #{tpu_custom_call.1} parent=1 // pred_region
      %104 = dma.done [#allocation3], 64
    $region29: #{tpu_custom_call.1} parent=1 // pred_fallthru
      _
    %105 = vsyncpa [#allocation3], 1

</llo_original>
